<compile_context>
chip_gen: v6e
topology: v6e:2x2x1
jax: 0.10.0
libtpu: 0.0.40
codegen_flags: <defaults>
</compile_context>

<pallas_src>
import functools

import jax
import jax.numpy as jnp
import numpy as np
from jax.experimental import pallas as pl
from jax.experimental.pallas import tpu as pltpu


# ----------------------------- tiling / HW helpers -----------------------------

@functools.lru_cache(maxsize=None)
def _vmem_capacity_bytes():
    try:
        return int(pltpu.get_tpu_info().vmem_capacity_bytes)
    except Exception:
        pass
    try:
        kind = jax.devices()[0].device_kind.lower()
        if ("v5" in kind) or ("v6" in kind):
            return 128 * 1024 * 1024
    except Exception:
        pass
    return 64 * 1024 * 1024            # conservative (v7x-sized) default


@functools.lru_cache(maxsize=None)
def _tiling_params():
    """(target input-block bytes, vmem_limit_bytes) for this generation."""
    vmem = _vmem_capacity_bytes()
    if vmem >= 128 * 1024 * 1024:      # v5e / v6e: plenty of VMEM headroom
        return 4 * 1024 * 1024, 64 * 1024 * 1024
    # v7x: 64 MiB physical VMEM; leave room for f32 temporaries + 4x I/O buffers
    return 2 * 1024 * 1024, 48 * 1024 * 1024


def _sublane(dtype):
    # native sublane tile: 8 rows for 4-byte, 16 for bf16, 32 for int8/fp8
    return max(8, 32 // dtype.itemsize)


def _choose_block_rows(rows, bytes_per_row, sub, target_bytes):
    if rows <= sub:
        return rows                                        # single full-extent block
    tgt = max(sub, (target_bytes // max(1, bytes_per_row)) // sub * sub)
    half = max(sub, (rows // 2) // sub * sub)              # keep >= 2 grid steps (megacore)
    block = min(tgt, half, max(sub, (rows // sub) * sub))
    # prefer an exact divisor of rows (no ragged last block); bounded search
    if rows % sub == 0:
        cand = block
        for _ in range(64):
            if cand < sub:
                break
            if rows % cand == 0:
                return cand
            cand -= sub
    return block


# ------------------------------- LayerNorm kernel ------------------------------

def _layernorm_kernel(x_ref, gamma_ref, beta_ref, o_ref, *, eps):
    # x_ref: (block_rows, D)  gamma/beta: (1, D) f32  o_ref: (block_rows, D)
    x = x_ref[...].astype(jnp.float32)
    inv_d = 1.0 / x.shape[-1]
    s = jnp.sum(x, axis=-1, keepdims=True)                 # single pass over lanes
    s2 = jnp.sum(x * x, axis=-1, keepdims=True)
    mean = s * inv_d
    var = jnp.maximum(s2 * inv_d - mean * mean, 0.0)       # biased var (PyTorch LN)
    inv = jax.lax.rsqrt(var + eps)                          # EUP slot, ~free
    o_ref[...] = ((x - mean) * inv * gamma_ref[...] + beta_ref[...]).astype(o_ref.dtype)


def layer_norm(x, gamma, beta, *, eps=1e-5, block_rows=None):
    """nn.LayerNorm(dim) over the last axis of x as a Pallas TPU kernel."""
    orig_shape = x.shape
    D = int(orig_shape[-1])
    rows = int(np.prod(orig_shape[:-1])) if len(orig_shape) > 1 else 1

    # TODO(synk): if D is not a multiple of 128 the trailing lane axis gets
    # masked stores; real model dims (>=128) are fine, narrow D works but is slow.
    x2 = x.reshape(rows, D)                                 # lane-dense: feature dim last
    g2 = gamma.astype(jnp.float32).reshape(1, D)            # pre-cast once, resident
    b2 = beta.astype(jnp.float32).reshape(1, D)

    sub = _sublane(x2.dtype)
    target_bytes, vmem_limit = _tiling_params()
    if block_rows is None:
        block_rows = _choose_block_rows(rows, D * x2.dtype.itemsize, sub, target_bytes)
    block_rows = max(1, min(int(block_rows), rows))

    grid = (pl.cdiv(rows, block_rows),)

    out = pl.pallas_call(
        functools.partial(_layernorm_kernel, eps=eps),
        out_shape=jax.ShapeDtypeStruct((rows, D), x2.dtype),
        grid_spec=pltpu.PrefetchScalarGridSpec(
            num_scalar_prefetch=0,
            grid=grid,
            in_specs=[
                pl.BlockSpec((block_rows, D), lambda i: (i, 0)),
                pl.BlockSpec((1, D), lambda i: (0, 0)),     # gamma, resident
                pl.BlockSpec((1, D), lambda i: (0, 0)),     # beta,  resident
            ],
            out_specs=pl.BlockSpec((block_rows, D), lambda i: (i, 0)),
        ),
        compiler_params=pltpu.CompilerParams(
            dimension_semantics=("parallel",),
            vmem_limit_bytes=vmem_limit,
        ),
    )(x2, g2, b2)
    return out.reshape(orig_shape)


# ------------------------- fused LayerNorm + Linear kernel ----------------------

def _layernorm_linear_kernel(x_ref, gamma_ref, beta_ref, w_ref, bias_ref, o_ref,
                             y_ref, *, eps):
    # x_ref: (bm, D)  w_ref: (D, bn)  bias_ref: (1, bn) f32  o_ref: (bm, bn)
    # y_ref: (bm, D) VMEM scratch holding the normalized rows for this row block.
    j = pl.program_id(1)

    @pl.when(j == 0)                                        # normalize once per row block
    def _():
        x = x_ref[...].astype(jnp.float32)
        inv_d = 1.0 / x.shape[-1]
        s = jnp.sum(x, axis=-1, keepdims=True)
        s2 = jnp.sum(x * x, axis=-1, keepdims=True)
        mean = s * inv_d
        var = jnp.maximum(s2 * inv_d - mean * mean, 0.0)
        inv = jax.lax.rsqrt(var + eps)
        y = (x - mean) * inv * gamma_ref[...] + beta_ref[...]
        y_ref[...] = y.astype(y_ref.dtype)

    acc = jnp.dot(y_ref[...], w_ref[...], preferred_element_type=jnp.float32)
    o_ref[...] = (acc + bias_ref[...]).astype(o_ref.dtype)


def prenorm_linear(x, gamma, beta, w, bias=None, *, eps=1e-5,
                   block_rows=None, block_n=None):
    """Fused PreNorm(dim, Linear): Linear(LayerNorm(x)) without an HBM round-trip."""
    orig_shape = x.shape
    D = int(orig_shape[-1])
    N = int(w.shape[-1])
    rows = int(np.prod(orig_shape[:-1])) if len(orig_shape) > 1 else 1

    x2 = x.reshape(rows, D)
    g2 = gamma.astype(jnp.float32).reshape(1, D)
    b2 = beta.astype(jnp.float32).reshape(1, D)
    if bias is None:
        bias = jnp.zeros((N,), dtype=jnp.float32)
    bias2 = bias.astype(jnp.float32).reshape(1, N)

    if block_n is None:
        block_n = min(N, 512) if N % 128 == 0 else N
    block_n = max(1, min(int(block_n), N))

    sub = _sublane(x2.dtype)
    target_bytes, vmem_limit = _tiling_params()
    if block_rows is None:
        # budget covers the x block + the output block together
        bytes_per_row = (D + block_n) * x2.dtype.itemsize
        block_rows = _choose_block_rows(rows, bytes_per_row, sub, target_bytes)
    block_rows = max(1, min(int(block_rows), rows))

    grid = (pl.cdiv(rows, block_rows), pl.cdiv(N, block_n))

    out = pl.pallas_call(
        functools.partial(_layernorm_linear_kernel, eps=eps),
        out_shape=jax.ShapeDtypeStruct((rows, N), x2.dtype),
        grid_spec=pltpu.PrefetchScalarGridSpec(
            num_scalar_prefetch=0,
            grid=grid,
            in_specs=[
                pl.BlockSpec((block_rows, D), lambda i, j: (i, 0)),   # x: constant over j
                pl.BlockSpec((1, D), lambda i, j: (0, 0)),            # gamma
                pl.BlockSpec((1, D), lambda i, j: (0, 0)),            # beta
                pl.BlockSpec((D, block_n), lambda i, j: (0, j)),      # weight, streamed
                pl.BlockSpec((1, block_n), lambda i, j: (0, j)),      # bias
            ],
            out_specs=pl.BlockSpec((block_rows, block_n), lambda i, j: (i, j)),
            scratch_shapes=[pltpu.VMEM((block_rows, D), x2.dtype)],
        ),
        compiler_params=pltpu.CompilerParams(
            dimension_semantics=("parallel", "arbitrary"),
            vmem_limit_bytes=vmem_limit,
        ),
    )(x2, g2, b2, w, bias2)
    return out.reshape(orig_shape[:-1] + (N,))


# ----------------------------------- PreNorm ------------------------------------

def prenorm(x, gamma, beta, fn, *args, eps=1e-5, **kwargs):
    """PreNorm.forward: fn(LayerNorm(x), *args, **kwargs).

    TODO(synk): `fn` is an arbitrary wrapped nn.Module in the PyTorch code and
    cannot be fused generically; it runs as a plain JAX callable. When `fn`
    starts with a Linear projection, use prenorm_linear() for the fused path.
    """
    return fn(layer_norm(x, gamma, beta, eps=eps), *args, **kwargs)


# ------------------------------------- test -------------------------------------

if __name__ == "__main__":
    key = jax.random.PRNGKey(0)
    k1, k2, k3, k4, k5 = jax.random.split(key, 5)

    B, S, D, N = 2, 8, 128, 128                  # batch=2, seq=8, hidden=128
    x = jax.random.normal(k1, (B, S, D), dtype=jnp.float32)
    gamma = 1.0 + 0.1 * jax.random.normal(k2, (D,), dtype=jnp.float32)
    beta = 0.1 * jax.random.normal(k3, (D,), dtype=jnp.float32)
    w = jax.random.normal(k4, (D, N), dtype=jnp.float32) / np.sqrt(D)
    bias = 0.1 * jax.random.normal(k5, (N,), dtype=jnp.float32)

    fn = lambda y: jnp.dot(y, w) + bias          # stand-in for the wrapped sub-module

    def ln_ref(xx):
        m = jnp.mean(xx, axis=-1, keepdims=True)
        v = jnp.mean((xx - m) ** 2, axis=-1, keepdims=True)
        return (xx - m) / jnp.sqrt(v + 1e-5) * gamma + beta

    ref = fn(ln_ref(x))

    # Path 1: generic PreNorm (Pallas LayerNorm, fn as plain JAX).
    out1 = jax.block_until_ready(jax.jit(lambda xx: prenorm(xx, gamma, beta, fn))(x))
    # Path 2: fused LayerNorm + Linear Pallas kernel.
    out2 = jax.block_until_ready(
        jax.jit(lambda xx: prenorm_linear(xx, gamma, beta, w, bias))(x))
    # Standalone LayerNorm check.
    ln_out = jax.block_until_ready(jax.jit(lambda xx: layer_norm(xx, gamma, beta))(x))

    assert out1.shape == ref.shape and out2.shape == ref.shape
    np.testing.assert_allclose(np.asarray(out1), np.asarray(ref), rtol=1e-4, atol=1e-5)
    np.testing.assert_allclose(np.asarray(out2), np.asarray(ref), rtol=1e-4, atol=1e-5)
    np.testing.assert_allclose(np.asarray(ln_out), np.asarray(ln_ref(x)),
                               rtol=1e-4, atol=1e-5)

    print("KERNEL_OK")
</pallas_src>

<mosaic_0001>
module attributes {stable_mosaic.version = 11 : i64} {
  func.func @_layernorm_kernel(%arg0: i32, %arg1: memref<8x128xf32, #tpu.memory_space<vmem>>, %arg2: memref<1x128xf32, #tpu.memory_space<vmem>>, %arg3: memref<1x128xf32, #tpu.memory_space<vmem>>, %arg4: memref<8x128xf32, #tpu.memory_space<vmem>>) attributes {dimension_semantics = [#tpu.dimension_semantics<parallel>], iteration_bounds = array<i64: 2>, scalar_prefetch = 0 : i64, scratch_operands = 0 : i64, tpu.core_type = #tpu.core_type<tc>, window_params = [{transform_indices = @transform_0, window_bounds = array<i64: 8, 128>}, {pipeline_mode = #tpu.pipeline_mode<synchronous>, transform_indices = @transform_1, window_bounds = array<i64: 1, 128>}, {pipeline_mode = #tpu.pipeline_mode<synchronous>, transform_indices = @transform_2, window_bounds = array<i64: 1, 128>}, {transform_indices = @transform_3, window_bounds = array<i64: 8, 128>}]} {
    %c0 = arith.constant 0 : index
    %c0_0 = arith.constant 0 : index
    %0 = vector.load %arg1[%c0, %c0_0] : memref<8x128xf32, #tpu.memory_space<vmem>>, vector<8x128xf32>
    %cst = arith.constant dense<0.000000e+00> : vector<8xf32>
    %1 = vector.multi_reduction <add>, %0, %cst [1] : vector<8x128xf32> to vector<8xf32>
    %2 = vector.shape_cast %1 : vector<8xf32> to vector<8x1xf32>
    %3 = arith.mulf %0, %0 : vector<8x128xf32>
    %cst_1 = arith.constant dense<0.000000e+00> : vector<8xf32>
    %4 = vector.multi_reduction <add>, %3, %cst_1 [1] : vector<8x128xf32> to vector<8xf32>
    %5 = vector.shape_cast %4 : vector<8xf32> to vector<8x1xf32>
    %cst_2 = arith.constant 7.812500e-03 : f32
    %6 = vector.broadcast %cst_2 : f32 to vector<8x1xf32>
    %7 = arith.mulf %2, %6 : vector<8x1xf32>
    %cst_3 = arith.constant 7.812500e-03 : f32
    %8 = vector.broadcast %cst_3 : f32 to vector<8x1xf32>
    %9 = arith.mulf %5, %8 : vector<8x1xf32>
    %10 = arith.mulf %7, %7 : vector<8x1xf32>
    %11 = arith.subf %9, %10 : vector<8x1xf32>
    %cst_4 = arith.constant 0.000000e+00 : f32
    %12 = vector.broadcast %cst_4 : f32 to vector<8x1xf32>
    %13 = arith.maximumf %11, %12 : vector<8x1xf32>
    %cst_5 = arith.constant 9.99999974E-6 : f32
    %14 = vector.broadcast %cst_5 : f32 to vector<8x1xf32>
    %15 = arith.addf %13, %14 : vector<8x1xf32>
    %16 = math.rsqrt %15 : vector<8x1xf32>
    %17 = vector.broadcast %7 : vector<8x1xf32> to vector<8x128xf32>
    %18 = arith.subf %0, %17 : vector<8x128xf32>
    %19 = vector.broadcast %16 : vector<8x1xf32> to vector<8x128xf32>
    %20 = arith.mulf %18, %19 : vector<8x128xf32>
    %c0_6 = arith.constant 0 : index
    %c0_7 = arith.constant 0 : index
    %21 = vector.load %arg2[%c0_6, %c0_7] : memref<1x128xf32, #tpu.memory_space<vmem>>, vector<1x128xf32>
    %22 = vector.broadcast %21 : vector<1x128xf32> to vector<8x128xf32>
    %23 = arith.mulf %20, %22 : vector<8x128xf32>
    %c0_8 = arith.constant 0 : index
    %c0_9 = arith.constant 0 : index
    %24 = vector.load %arg3[%c0_8, %c0_9] : memref<1x128xf32, #tpu.memory_space<vmem>>, vector<1x128xf32>
    %25 = vector.broadcast %24 : vector<1x128xf32> to vector<8x128xf32>
    %26 = arith.addf %23, %25 : vector<8x128xf32>
    %c0_10 = arith.constant 0 : index
    %c0_11 = arith.constant 0 : index
    %27 = vector.load %arg4[%c0_10, %c0_11] : memref<8x128xf32, #tpu.memory_space<vmem>>, vector<8x128xf32>
    tpu.vector_store %arg4[%c0_10, %c0_11], %26 {strides = array<i32>} : memref<8x128xf32, #tpu.memory_space<vmem>>, vector<8x128xf32>,
    return
  }
  func.func @transform_0(%arg0: i32) -> (i32, i32) {
    %c0_i32 = arith.constant 0 : i32
    %c0_i32_0 = arith.constant 0 : i32
    return %arg0, %c0_i32 : i32, i32
  }
  func.func @transform_1(%arg0: i32) -> (i32, i32) {
    %c0_i32 = arith.constant 0 : i32
    %c0_i32_0 = arith.constant 0 : i32
    %c0_i32_1 = arith.constant 0 : i32
    return %c0_i32, %c0_i32_0 : i32, i32
  }
  func.func @transform_2(%arg0: i32) -> (i32, i32) {
    %c0_i32 = arith.constant 0 : i32
    %c0_i32_0 = arith.constant 0 : i32
    %c0_i32_1 = arith.constant 0 : i32
    return %c0_i32, %c0_i32_0 : i32, i32
  }
  func.func @transform_3(%arg0: i32) -> (i32, i32) {
    %c0_i32 = arith.constant 0 : i32
    %c0_i32_0 = arith.constant 0 : i32
    return %arg0, %c0_i32 : i32, i32
  }
}

</mosaic_0001>

<llo_original>
// kernel: _lambda_.1
$region0: #{_lambda_.1}
  #allocation0 [shape = 'u32[]', space=smem, size = 0x4, offset = 0x4, fixed_abs, tag = 'smem constant byte address 0x4 - core index']
  #allocation1 [shape = 'u32[144,128]{1,0:T(1,128)}', space=vmem, size = 0x12000, scoped, tag = 'internal scratch']
  %s0 = inlined_call_operand.hbm [shape: f32[16,128], index: 0, kind: input, shape index: {}]
  %s1 = inlined_call_operand.vmem [shape: f32[1,128], index: 1, kind: input, shape index: {}]
  %s2 = inlined_call_operand.vmem [shape: f32[1,128], index: 2, kind: input, shape index: {}]
  %s3 = inlined_call_operand.vmem [shape: f32[16,128], index: 3, kind: output, shape index: {}]
  %s4 = sld [smem:[#allocation0]]
  $region49: #{_lambda_.1} parent=0
    _
  %s6 = ssub.s32 1, %s4
  %s7 = scalar_select 0, %s6, %s4
  $region1: #{_lambda_.1} parent=0
    #allocation2 [shape = 'u8[8192]{0}', space=vmem, size = 0x2000, scoped, tag = 'input window, operand 0']
    #allocation3 [shape = 's32[2]{0}', space=sflag, size = 0x8, scoped, tag = 'scoped memory for _lambda_.1']
    %8 = vsyncpa [#allocation3], 0
    %s9 = scalar_lea.sflag [#allocation3], 1
    %10 = vsyncpa %s9, 0
    loop: start=0, step=1, limit=4
    $region2: #{_lambda_.1} parent=1 // loop_pre_header
      _
    $region3: #{_lambda_.1} parent=1 // loop_header
      %s12 = sphi 0, %s16
      %p13 = scmp.ge.s32.totalorder %s12, 4
      %s22 = sphi 0, %s24
      %s25 = sphi 0, %s22
      %s26 = sphi 0, %s25
      %s42 = sphi 0, %s26
      %s46 = sphi 0, %s46
      %s48 = sphi 0, %s46
      %s49 = sphi 0, %s48
      %s63 = sphi 0, %s49
      %s67 = sphi 0, %s67
      %s69 = sphi 0, %s67
      %s70 = sphi 0, %s69
      %s84 = sphi 0, %s70
      %s90 = sphi 0, %s92
      %s93 = sphi 0, %s90
      %s94 = sphi 0, %s93
      %s110 = sphi 0, %s94
    $region4: #{_lambda_.1} parent=1 // loop_header_branch
      %15 = sbr.rel (%p13) target = $region8
    $region5: #{_lambda_.1} parent=1 // loop_body
      %s17 = ssub.s32 %s12, 1
      %s18 = ssub.s32 %s12, 2
      %s19 = sadd.s32 %s12, 1
      %s20 = ssub.s32 %s12, %s19
      %p21 = scmp.eq.s32.totalorder %s20, 0
      %s23 = sadd.s32 %s22, 1
      %s24 = scalar_select %p21, %s22, %s23
      %p27 = pneg %p21
      %p28 = scmp.eq.s32.totalorder %s12, 1
      %p29 = por %p27, %p28
      %p30 = scmp.ne.s32.totalorder %s22, %s25
      %p31 = scmp.eq.s32.totalorder %s12, 0
      %p32 = por %p30, %p31
      %p33 = scmp.ne.s32.totalorder %s22, %s25
      %p34 = scmp.eq.s32.totalorder %s17, 1
      %p35 = por %p33, %p34
      %p36 = scmp.ne.s32.totalorder %s25, %s26
      %p37 = scmp.eq.s32.totalorder %s17, 0
      %p38 = por %p36, %p37
      %p39 = scmp.ne.s32.totalorder %s25, %s26
      %p40 = scmp.eq.s32.totalorder %s18, 1
      %p41 = por %p39, %p40
      %p43 = scmp.ne.s32.totalorder %s26, %s42
      %p44 = scmp.eq.s32.totalorder %s18, 0
      %p45 = por %p43, %p44
      %s47 = sadd.s32 %s46, 1
      %p50 = scmp.eq.s32.totalorder %s12, 1
      %p51 = scmp.ne.s32.totalorder %s46, %s48
      %p52 = scmp.eq.s32.totalorder %s12, 0
      %p53 = por %p51, %p52
      %p54 = scmp.ne.s32.totalorder %s46, %s48
      %p55 = scmp.eq.s32.totalorder %s17, 1
      %p56 = por %p54, %p55
      %p57 = scmp.ne.s32.totalorder %s48, %s49
      %p58 = scmp.eq.s32.totalorder %s17, 0
      %p59 = por %p57, %p58
      %p60 = scmp.ne.s32.totalorder %s48, %s49
      %p61 = scmp.eq.s32.totalorder %s18, 1
      %p62 = por %p60, %p61
      %p64 = scmp.ne.s32.totalorder %s49, %s63
      %p65 = scmp.eq.s32.totalorder %s18, 0
      %p66 = por %p64, %p65
      %s68 = sadd.s32 %s67, 1
      %p71 = scmp.eq.s32.totalorder %s12, 1
      %p72 = scmp.ne.s32.totalorder %s67, %s69
      %p73 = scmp.eq.s32.totalorder %s12, 0
      %p74 = por %p72, %p73
      %p75 = scmp.ne.s32.totalorder %s67, %s69
      %p76 = scmp.eq.s32.totalorder %s17, 1
      %p77 = por %p75, %p76
      %p78 = scmp.ne.s32.totalorder %s69, %s70
      %p79 = scmp.eq.s32.totalorder %s17, 0
      %p80 = por %p78, %p79
      %p81 = scmp.ne.s32.totalorder %s69, %s70
      %p82 = scmp.eq.s32.totalorder %s18, 1
      %p83 = por %p81, %p82
      %p85 = scmp.ne.s32.totalorder %s70, %s84
      %p86 = scmp.eq.s32.totalorder %s18, 0
      %p87 = por %p85, %p86
      %s88 = ssub.s32 %s12, %s19
      %p89 = scmp.eq.s32.totalorder %s88, 0
      %s91 = sadd.s32 %s90, 1
      %s92 = scalar_select %p89, %s90, %s91
      %p95 = pneg %p89
      %p96 = scmp.eq.s32.totalorder %s12, 1
      %p97 = por %p95, %p96
      %p98 = scmp.ne.s32.totalorder %s90, %s93
      %p99 = scmp.eq.s32.totalorder %s12, 0
      %p100 = por %p98, %p99
      %p101 = scmp.ne.s32.totalorder %s90, %s93
      %p102 = scmp.eq.s32.totalorder %s17, 1
      %p103 = por %p101, %p102
      %p104 = scmp.ne.s32.totalorder %s93, %s94
      %p105 = scmp.eq.s32.totalorder %s17, 0
      %p106 = por %p104, %p105
      %p107 = scmp.ne.s32.totalorder %s93, %s94
      %p108 = scmp.eq.s32.totalorder %s18, 1
      %p109 = por %p107, %p108
      %p111 = scmp.ne.s32.totalorder %s94, %s110
      %p112 = scmp.eq.s32.totalorder %s18, 0
      %p113 = por %p111, %p112
      %p114 = scmp.le.s32.totalorder 1, %s12
      %p115 = scmp.lt.s32.totalorder %s12, 3
      %p116 = pnand %p114, %p115
      %p117 = pneg %p116
      // Predicated region
      $region9: #{_lambda_.1} parent=5 // pred_check
        _
      $region10: #{_lambda_.1} parent=5 // pred_check_branch
        %119 = sbr.rel (%p116) target = $region12
      $region11: #{_lambda_.1} parent=5 // pred_region
        %s120 = ssub.s32 %s12, 1
        // Predicated region
        $region13: #{_lambda_.1} parent=11 // pred_check
          %p121 = pneg %p59
        $region14: #{_lambda_.1} parent=11 // pred_check_branch
          %123 = sbr.rel (%p121) target = $region16
        $region15: #{_lambda_.1} parent=11 // pred_region
          _
        $region16: #{_lambda_.1} parent=11 // pred_fallthru
          _
        // Predicated region
        $region17: #{_lambda_.1} parent=11 // pred_check
          %p124 = pneg %p80
        $region18: #{_lambda_.1} parent=11 // pred_check_branch
          %126 = sbr.rel (%p124) target = $region20
        $region19: #{_lambda_.1} parent=11 // pred_region
          _
        $region20: #{_lambda_.1} parent=11 // pred_fallthru
          _
      $region12: #{_lambda_.1} parent=5 // pred_fallthru
        _
      %p127 = scmp.lt.s32.totalorder %s12, 2
      // Predicated region
      $region21: #{_lambda_.1} parent=5 // pred_check
        %p128 = pneg %p127
      $region22: #{_lambda_.1} parent=5 // pred_check_branch
        %130 = sbr.rel (%p128) target = $region24
      $region23: #{_lambda_.1} parent=5 // pred_region
        // Predicated region
        $region25: #{_lambda_.1} parent=23 // pred_check
          %p131 = pneg %p32
        $region26: #{_lambda_.1} parent=23 // pred_check_branch
          %133 = sbr.rel (%p131) target = $region28
        $region27: #{_lambda_.1} parent=23 // pred_region
          %s134 = sand.u32 %s22, 1
          %s135 = scalar_lea.sflag [#allocation3], %s134
          %s136 = sand.u32 %s22, 1
          %s137 = smul.addr %s136, 8
          %s138 = scalar_lea.vmem [#allocation2], %s137
          %s140 = ssub.s32 128, 128
          %141 = vsyncadd %s135, %s140
          %s142 = smul.addr %s12, 128
          %s143 = scalar_lea.hbm %s0, %s142
          %s145 = sshll.u32 %s138, 4
          %s146 = int_to_ptr.vmem [resolvable:$true] %s145
          %148 = dma.hbm_to_vmem [thread:$0]  %s143, 128, %s146, %s135
        $region28: #{_lambda_.1} parent=23 // pred_fallthru
          _
      $region24: #{_lambda_.1} parent=5 // pred_fallthru
        _
      %p149 = scmp.le.s32.totalorder 1, %s12
      %p150 = scmp.lt.s32.totalorder %s12, 3
      %p151 = pnand %p149, %p150
      %p152 = pneg %p151
      // Predicated region
      $region29: #{_lambda_.1} parent=5 // pred_check
        _
      $region30: #{_lambda_.1} parent=5 // pred_check_branch
        %154 = sbr.rel (%p151) target = $region32
      $region31: #{_lambda_.1} parent=5 // pred_region
        %s155 = ssub.s32 %s12, 1
        %s156 = sand.u32 %s25, 1
        %s157 = scalar_lea.sflag [#allocation3], %s156
        %s158 = sand.u32 %s25, 1
        %s159 = smul.addr %s158, 8
        %s160 = scalar_lea.vmem [#allocation2], %s159
        // Predicated region
        $region33: #{_lambda_.1} parent=31 // pred_check
          %p161 = pneg %p38
        $region34: #{_lambda_.1} parent=31 // pred_check_branch
          %163 = sbr.rel (%p161) target = $region36
        $region35: #{_lambda_.1} parent=31 // pred_region
          %164 = dma.done %s157, 128
        $region36: #{_lambda_.1} parent=31 // pred_fallthru
          _
        %s165 = sand.u32 %s25, 1
        %s166 = scalar_lea.sflag [#allocation3], %s165
        %s167 = sand.u32 %s25, 1
        %s168 = smul.addr %s167, 8
        %s169 = scalar_lea.vmem [#allocation2], %s168
        %p170 = pneg %p38
        %p171 = pneg %p35
        %p172 = pneg %p59
        %p173 = pneg %p56
        %p174 = pneg %p80
        %p175 = pneg %p77
        %p176 = pneg %p106
        %p177 = pneg %p103
        %p178 = scmp.lt.s32.totalorder %s17, 1
        %s179 = scalar_select %p178, %s17, 1
        %s180 = smul.addr %s179, 8
        %s181 = scalar_lea.vmem %s3, %s180
        %p182 = scmp.lt.s32.totalorder %s17, 1
        %s183 = scalar_select %p182, %s17, 1
        %s184 = smul.addr %s183, 8
        %s185 = scalar_lea.vmem %s3, %s184
        %v186 = vld [vmem:[%s160] sm:$0xff]
        %187 = vadd.xlane.f32.xlu0 %v186
        %v188 = vpop.xlane.xlu0 %187
        %v189 = vmul.f32 %v186, %v186
        %190 = vadd.xlane.f32.xlu0 %v189
        %v191 = vpop.xlane.xlu0 %190
        %v192 = vmul.f32 %v188, 0.0078125
        %v193 = vmul.f32 %v191, 0.0078125
        %v194 = vmul.f32 %v192, %v192
        %v195 = vsub.f32 %v193, %v194
        %v196 = vmax.f32 %v195, 0.0
        %v197 = vadd.f32 %v196, 1e-05
        %v198 = vrsqrt.pop %v197
        %v199 = vsub.f32 %v186, %v192
        %v200 = vmul.f32 %v199, %v198
        %v201 = vld [vmem:[%s1] sm:$0x1]
        %v203 = vlaneseq
        %v204 = vshrl.u32 %v203, 7
        %v205 = vsub.s32 0, %v204
        %v206 = vrot.slane %v201, %v205
        %v208 = vmul.f32 %v200, %v206
        %v209 = vld [vmem:[%s2] sm:$0x1]
        %v211 = vlaneseq
        %v212 = vshrl.u32 %v211, 7
        %v213 = vsub.s32 0, %v212
        %v214 = vrot.slane %v209, %v213
        %v216 = vadd.f32 %v208, %v214
        %217 = vst [vmem:[%s185] sm:$0xff] %v216
        %p218 = scmp.lt.s32.totalorder %s17, 1
        %s219 = scalar_select %p218, %s17, 1
        %s220 = smul.addr %s219, 8
        %s221 = scalar_lea.vmem %s3, %s220
        // Predicated region
        $region37: #{_lambda_.1} parent=31 // pred_check
          %p222 = pneg %p103
        $region38: #{_lambda_.1} parent=31 // pred_check_branch
          %224 = sbr.rel (%p222) target = $region40
        $region39: #{_lambda_.1} parent=31 // pred_region
          _
        $region40: #{_lambda_.1} parent=31 // pred_fallthru
          _
      $region32: #{_lambda_.1} parent=5 // pred_fallthru
        _
      %p225 = scmp.le.s32.totalorder 2, %s12
      // Predicated region
      $region41: #{_lambda_.1} parent=5 // pred_check
        %p226 = pneg %p225
      $region42: #{_lambda_.1} parent=5 // pred_check_branch
        %228 = sbr.rel (%p226) target = $region44
      $region43: #{_lambda_.1} parent=5 // pred_region
        %s229 = ssub.s32 %s12, 2
        // Predicated region
        $region45: #{_lambda_.1} parent=43 // pred_check
          %p230 = pneg %p109
        $region46: #{_lambda_.1} parent=43 // pred_check_branch
          %232 = sbr.rel (%p230) target = $region48
        $region47: #{_lambda_.1} parent=43 // pred_region
          %p233 = scmp.lt.s32.totalorder %s18, 1
          %s234 = scalar_select %p233, %s18, 1
          %s235 = smul.addr %s234, 8
          %s236 = scalar_lea.vmem %s3, %s235
        $region48: #{_lambda_.1} parent=43 // pred_fallthru
          _
      $region44: #{_lambda_.1} parent=5 // pred_fallthru
        _
    $region6: #{_lambda_.1} parent=1 // loop_footer
      %s16 = sadd.s32 1, %s12
    $region7: #{_lambda_.1} parent=1 // loop_footer_branch
      %11 = sbr.rel target = $region3
    $region8: #{_lambda_.1} parent=1 // loop_exit
      _
    %237 = vsyncpa [#allocation3], 1
    %s238 = scalar_lea.sflag [#allocation3], 1
    %239 = vsyncpa %s238, 1

</llo_original>
